<compile_context>
chip_gen: v7x
topology: tpu7x:2x2x1
jax: 0.10.0
libtpu: 0.0.40
codegen_flags: <defaults>
</compile_context>

<pallas_src>
import functools
import math

import jax
import jax.numpy as jnp
from jax.experimental import pallas as pl
from jax.experimental.pallas import tpu as pltpu


def _round_up(n, m):
    return ((n + m - 1) // m) * m


def _physical_vmem_bytes():
    """Best-effort VMEM capacity query; conservative (v7x-safe) fallback."""
    try:
        return int(pltpu.get_tpu_info().vmem_capacity_bytes)
    except Exception:
        return 64 * 1024 * 1024


def _maybe_pad_cast(a, shape, dtype):
    """Zero-pad `a` into `shape` with dtype `dtype`; no-op if already matching."""
    if tuple(a.shape) == tuple(shape) and a.dtype == jnp.dtype(dtype):
        return a
    out = jnp.zeros(shape, dtype=dtype)
    idx = tuple(slice(0, s) for s in a.shape)
    return out.at[idx].set(a.astype(dtype))


def _ffn_kernel(x_ref, w1_ref, b1_ref, w2_ref, b2_ref, o_ref, acc_ref, *,
                approximate_gelu):
    """One (token-tile i, hidden-chunk kh) grid step.

    x_ref:  (tm, Dp)  activation tile (param_dtype)
    w1_ref: (Dp, th)  first-layer weight chunk
    b1_ref: (1, th)   first-layer bias chunk (f32)
    w2_ref: (th, Dp)  second-layer weight chunk
    b2_ref: (1, Dp)   second-layer bias (f32)
    o_ref:  (tm, Dp)  output tile
    acc_ref:(tm, Dp)  f32 accumulator, resident across the H (kh) axis
    """
    kh = pl.program_id(1)

    @pl.when(kh == 0)
    def _():
        # Seed the accumulator with the second-layer bias: saves one full
        # (tm, Dp) VPU pass in the epilogue.
        acc_ref[...] = jnp.broadcast_to(b2_ref[...], acc_ref.shape)

    # First linear on this hidden chunk: (tm, Dp) @ (Dp, th) -> f32 on the MXU.
    h = jnp.dot(x_ref[...], w1_ref[...], preferred_element_type=jnp.float32)
    h = h + b1_ref[...]

    if approximate_gelu:
        # tanh-approx GELU: tanh goes to the EUP slot (otherwise idle), which
        # relieves the VALU slot on v6e/v7x when bf16 MXU is the fast path.
        h = jax.nn.gelu(h, approximate=True)
    else:
        # Exact GELU (PyTorch nn.GELU default, approximate='none'), in f32:
        #   gelu(x) = 0.5 * x * (1 + erf(x / sqrt(2)))
        h = 0.5 * h * (1.0 + jax.lax.erf(h * (1.0 / math.sqrt(2.0))))

    # Second linear, accumulated over hidden chunks: (tm, th) @ (th, Dp).
    acc_ref[...] += jnp.dot(h.astype(w2_ref.dtype), w2_ref[...],
                            preferred_element_type=jnp.float32)

    @pl.when(kh == pl.num_programs(1) - 1)
    def _():
        o_ref[...] = acc_ref[...].astype(o_ref.dtype)


def feed_forward(x, w1, b1, w2, b2, *, tile_m=None, tile_h=None,
                 param_dtype=jnp.bfloat16, out_dtype=None,
                 approximate_gelu=False, vmem_limit_bytes=None):
    """FeedForward forward pass.

    x:  (B, S, D)
    w1: (D, H), b1: (H,)   -- transposed vs. PyTorch's (out, in) Linear storage
    w2: (H, D), b2: (D,)
    Returns (B, S, D) in out_dtype (default: x.dtype).

    Dropout(p=0) is the identity and is omitted.  Default param_dtype=bf16
    uses bf16 weights/activations with f32 MXU accumulation (matches a bf16
    PyTorch module, not the f32 one — pass param_dtype=jnp.float32 for exact
    f32 numerics).
    """
    # TODO(synk): dropout with p > 0 would need in-kernel pltpu.prng_seed /
    # prng_random_bits masking; the module default (p=0.0) is an identity.
    B, S, D = x.shape
    H = w1.shape[1]
    M = B * S
    out_dtype = x.dtype if out_dtype is None else out_dtype

    pb = jnp.dtype(param_dtype).itemsize
    ob = jnp.dtype(out_dtype).itemsize

    Dp = _round_up(D, 128)
    Hp_full = _round_up(H, 128)

    if vmem_limit_bytes is None:
        # ~85% of physical VMEM, capped: ~108 MiB on v5e/v6e (128 MiB),
        # ~54 MiB on v7x (64 MiB).  Fallback query value keeps v7x safe.
        vmem_limit_bytes = min(int(0.85 * _physical_vmem_bytes()),
                               110 * 1024 * 1024)
    budget = max(vmem_limit_bytes - (4 << 20), 8 << 20)  # headroom

    # --- hidden-chunk size (th) -------------------------------------------
    weights_bytes = 2 * Dp * Hp_full * pb  # w1 + w2, one copy
    if tile_h is None:
        if 2 * weights_bytes <= budget // 2:
            tile_h = Hp_full            # weights-resident fast path (kh grid = 1)
        else:
            tile_h = 512                # stream H in chunks
    th = min(_round_up(tile_h, 128), Hp_full)
    # Keep double-buffered (Dp,th)+(th,Dp) weight chunks within half the budget.
    while th > 128 and 4 * Dp * th * pb > budget // 2:
        th = max(128, (th // 2) // 128 * 128)
    Hp = _round_up(H, th)

    # --- token-tile size (tm) ---------------------------------------------
    w_chunk_bytes = 4 * Dp * th * pb                 # w1+w2 chunks, 2 buffers
    per_row = Dp * (2 * pb + 2 * ob + 4)             # x(2buf) + out(2buf) + acc
    avail = budget - w_chunk_bytes
    tm_cap = max(8, (avail // per_row) // 8 * 8) if avail > per_row * 8 else 8
    if tile_m is None:
        tile_m = 1024                                # roofline-ish upper cap
    tm = _round_up(min(tile_m, tm_cap, _round_up(M, 8)), 8)
    if M > 8:
        # Keep >= 2 M tiles so the "parallel" axis can feed both v7x TCs.
        tm = min(tm, _round_up((M + 1) // 2, 8))
    tm = max(tm, 8)
    Mp = _round_up(M, tm)

    # --- pad / cast (skipped when already aligned & right dtype) -----------
    # Zero padding is exact: padded hidden columns give GELU(0 + 0) = 0 and
    # contribute nothing to the second matmul; padded rows / feature lanes of
    # the output are sliced off below.
    x2d = _maybe_pad_cast(x.reshape(M, D), (Mp, Dp), param_dtype)
    w1p = _maybe_pad_cast(w1, (Dp, Hp), param_dtype)
    b1p = _maybe_pad_cast(b1.reshape(1, H), (1, Hp), jnp.float32)
    w2p = _maybe_pad_cast(w2, (Hp, Dp), param_dtype)
    b2p = _maybe_pad_cast(b2.reshape(1, D), (1, Dp), jnp.float32)

    grid = (Mp // tm, Hp // th)     # M parallel, H (reduction) last / arbitrary
    n_m_tiles, n_h_chunks = grid
    weights_resident = (n_h_chunks == 1)
    weight_traffic = (1 if weights_resident else n_m_tiles) * 2 * Dp * Hp * pb

    cost = pl.CostEstimate(
        flops=4 * Mp * Dp * Hp,                       # two matmuls: 2*M*D*H each
        transcendentals=(Mp * Hp) if approximate_gelu else 0,  # erf is VALU, not EUP
        bytes_accessed=(Mp * Dp * pb                  # x in
                        + Mp * Dp * ob                # out
                        + weight_traffic              # w1+w2 (re-)streaming
                        + (Hp + Dp) * 4),             # biases
    )

    kernel = functools.partial(_ffn_kernel, approximate_gelu=approximate_gelu)

    out2d = pl.pallas_call(
        kernel,
        out_shape=jax.ShapeDtypeStruct((Mp, Dp), out_dtype),
        grid_spec=pltpu.PrefetchScalarGridSpec(
            num_scalar_prefetch=0,
            grid=grid,
            in_specs=[
                pl.BlockSpec((tm, Dp), lambda i, kh: (i, 0)),    # x tile
                pl.BlockSpec((Dp, th), lambda i, kh: (0, kh)),   # w1 chunk
                pl.BlockSpec((1, th), lambda i, kh: (0, kh)),    # b1 chunk
                pl.BlockSpec((th, Dp), lambda i, kh: (kh, 0)),   # w2 chunk
                pl.BlockSpec((1, Dp), lambda i, kh: (0, 0)),     # b2
            ],
            out_specs=pl.BlockSpec((tm, Dp), lambda i, kh: (i, 0)),
            scratch_shapes=[pltpu.VMEM((tm, Dp), jnp.float32)],
        ),
        compiler_params=pltpu.CompilerParams(
            dimension_semantics=("parallel", "arbitrary"),
            vmem_limit_bytes=vmem_limit_bytes,
        ),
        cost_estimate=cost,
    )(x2d, w1p, b1p, w2p, b2p)

    if (Mp, Dp) != (M, D):
        out2d = out2d[:M, :D]
    return out2d.reshape(B, S, D)


def _reference(x, w1, b1, w2, b2):
    h = x @ w1 + b1
    h = 0.5 * h * (1.0 + jax.lax.erf(h / jnp.sqrt(2.0)))
    return h @ w2 + b2


if __name__ == "__main__":
    key = jax.random.PRNGKey(0)

    def make_inputs(B, S, D, H, k):
        kx, kw1, kb1, kw2, kb2 = jax.random.split(k, 5)
        x = jax.random.normal(kx, (B, S, D), dtype=jnp.float32)
        w1 = jax.random.normal(kw1, (D, H), dtype=jnp.float32) / math.sqrt(D)
        b1 = jax.random.normal(kb1, (H,), dtype=jnp.float32) * 0.01
        w2 = jax.random.normal(kw2, (H, D), dtype=jnp.float32) / math.sqrt(H)
        b2 = jax.random.normal(kb2, (D,), dtype=jnp.float32) * 0.01
        return x, w1, b1, w2, b2

    k1, k2 = jax.random.split(key)

    # 1) Toy config consistent with the module (exercises the padding path),
    #    f32 params -> exact match against the reference.
    x, w1, b1, w2, b2 = make_inputs(2, 8, 32, 64, k1)
    out = jax.block_until_ready(
        feed_forward(x, w1, b1, w2, b2, param_dtype=jnp.float32))
    ref = _reference(x, w1, b1, w2, b2)
    assert out.shape == x.shape
    assert jnp.allclose(out, ref, atol=1e-5, rtol=1e-5), "f32 mismatch (toy)"

    # 2) Lane-aligned config exercising the (M, H) grid and the f32
    #    accumulator / b2-seeding path (tile_h < H so kh has 2 steps).
    x, w1, b1, w2, b2 = make_inputs(2, 64, 128, 256, k2)
    ref = _reference(x, w1, b1, w2, b2)
    out = jax.block_until_ready(
        feed_forward(x, w1, b1, w2, b2, param_dtype=jnp.float32,
                     tile_m=64, tile_h=128))
    assert jnp.allclose(out, ref, atol=1e-5, rtol=1e-5), "f32 mismatch (grid)"

    # 3) Default bf16 fast path (f32 MXU accumulation), weights-resident;
    #    bf16-aware tolerance vs. the f32 reference.
    out_bf16 = jax.block_until_ready(feed_forward(x, w1, b1, w2, b2))
    assert jnp.allclose(out_bf16, ref, atol=5e-2, rtol=5e-2), "bf16 mismatch"

    # 4) Optional tanh-approx GELU (EUP path on v6e/v7x).
    out_tanh = jax.block_until_ready(
        feed_forward(x, w1, b1, w2, b2, param_dtype=jnp.float32,
                     approximate_gelu=True))
    assert jnp.allclose(out_tanh, ref, atol=5e-2, rtol=5e-2), "tanh-GELU mismatch"

    print("KERNEL_OK")
</pallas_src>

<mosaic_0001>
module attributes {stable_mosaic.version = 11 : i64} {
  func.func @_ffn_kernel(%arg0: i32, %arg1: i32, %arg2: memref<8x128xf32, #tpu.memory_space<vmem>>, %arg3: memref<128x128xf32, #tpu.memory_space<vmem>>, %arg4: memref<1x128xf32, #tpu.memory_space<vmem>>, %arg5: memref<128x128xf32, #tpu.memory_space<vmem>>, %arg6: memref<1x128xf32, #tpu.memory_space<vmem>>, %arg7: memref<8x128xf32, #tpu.memory_space<vmem>>, %arg8: memref<8x128xf32, #tpu.memory_space<vmem>>) attributes {dimension_semantics = [#tpu.dimension_semantics<parallel>, #tpu.dimension_semantics<arbitrary>], iteration_bounds = array<i64: 2, 1>, scalar_prefetch = 0 : i64, scratch_operands = 1 : i64, tpu.core_type = #tpu.core_type<tc>, window_params = [{transform_indices = @transform_0, window_bounds = array<i64: 8, 128>}, {transform_indices = @transform_1, window_bounds = array<i64: 128, 128>}, {transform_indices = @transform_2, window_bounds = array<i64: 1, 128>}, {transform_indices = @transform_3, window_bounds = array<i64: 128, 128>}, {pipeline_mode = #tpu.pipeline_mode<synchronous>, transform_indices = @transform_4, window_bounds = array<i64: 1, 128>}, {transform_indices = @transform_5, window_bounds = array<i64: 8, 128>}]} {
    %c0_i32 = arith.constant 0 : i32
    %0 = arith.cmpi eq, %arg1, %c0_i32 : i32
    %1 = arith.extui %0 : i1 to i32
    %c0_i32_0 = arith.constant 0 : i32
    %2 = arith.cmpi ne, %1, %c0_i32_0 : i32
    scf.if %2 {
      %c0_18 = arith.constant 0 : index
      %c0_19 = arith.constant 0 : index
      %25 = vector.load %arg6[%c0_18, %c0_19] : memref<1x128xf32, #tpu.memory_space<vmem>>, vector<1x128xf32>
      %26 = vector.shape_cast %25 : vector<1x128xf32> to vector<1x128xf32>
      %27 = vector.broadcast %26 : vector<1x128xf32> to vector<8x128xf32>
      %c0_20 = arith.constant 0 : index
      %c0_21 = arith.constant 0 : index
      %28 = vector.load %arg8[%c0_20, %c0_21] : memref<8x128xf32, #tpu.memory_space<vmem>>, vector<8x128xf32>
      tpu.vector_store %arg8[%c0_20, %c0_21], %27 {strides = array<i32>} : memref<8x128xf32, #tpu.memory_space<vmem>>, vector<8x128xf32>,
    } else {
    }
    %c0 = arith.constant 0 : index
    %c0_1 = arith.constant 0 : index
    %3 = vector.load %arg2[%c0, %c0_1] : memref<8x128xf32, #tpu.memory_space<vmem>>, vector<8x128xf32>
    %c0_2 = arith.constant 0 : index
    %c0_3 = arith.constant 0 : index
    %4 = vector.load %arg3[%c0_2, %c0_3] : memref<128x128xf32, #tpu.memory_space<vmem>>, vector<128x128xf32>
    %cst = arith.constant dense<0.000000e+00> : vector<8x128xf32>
    %5 = tpu.matmul %3, %4, %cst {dimension_numbers = #tpu.dot_dimension_numbers<[1], [0], [0], [1], [0, 0, 1, 1], [], []>} : vector<8x128xf32>, vector<128x128xf32>, vector<8x128xf32> -> vector<8x128xf32>
    %c0_4 = arith.constant 0 : index
    %c0_5 = arith.constant 0 : index
    %6 = vector.load %arg4[%c0_4, %c0_5] : memref<1x128xf32, #tpu.memory_space<vmem>>, vector<1x128xf32>
    %7 = vector.broadcast %6 : vector<1x128xf32> to vector<8x128xf32>
    %8 = arith.addf %5, %7 : vector<8x128xf32>
    %cst_6 = arith.constant 5.000000e-01 : f32
    %9 = vector.broadcast %cst_6 : f32 to vector<8x128xf32>
    %10 = arith.mulf %9, %8 : vector<8x128xf32>
    %cst_7 = arith.constant 0.707106769 : f32
    %11 = vector.broadcast %cst_7 : f32 to vector<8x128xf32>
    %12 = arith.mulf %8, %11 : vector<8x128xf32>
    %13 = math.erf %12 : vector<8x128xf32>
    %cst_8 = arith.constant 1.000000e+00 : f32
    %14 = vector.broadcast %cst_8 : f32 to vector<8x128xf32>
    %15 = arith.addf %14, %13 : vector<8x128xf32>
    %16 = arith.mulf %10, %15 : vector<8x128xf32>
    %c0_9 = arith.constant 0 : index
    %c0_10 = arith.constant 0 : index
    %17 = vector.load %arg8[%c0_9, %c0_10] : memref<8x128xf32, #tpu.memory_space<vmem>>, vector<8x128xf32>
    %c0_11 = arith.constant 0 : index
    %c0_12 = arith.constant 0 : index
    %18 = vector.load %arg5[%c0_11, %c0_12] : memref<128x128xf32, #tpu.memory_space<vmem>>, vector<128x128xf32>
    %cst_13 = arith.constant dense<0.000000e+00> : vector<8x128xf32>
    %19 = tpu.matmul %16, %18, %cst_13 {dimension_numbers = #tpu.dot_dimension_numbers<[1], [0], [0], [1], [0, 0, 1, 1], [], []>} : vector<8x128xf32>, vector<128x128xf32>, vector<8x128xf32> -> vector<8x128xf32>
    %20 = arith.addf %17, %19 : vector<8x128xf32>
    %c0_14 = arith.constant 0 : index
    %c0_15 = arith.constant 0 : index
    %21 = vector.load %arg8[%c0_14, %c0_15] : memref<8x128xf32, #tpu.memory_space<vmem>>, vector<8x128xf32>
    tpu.vector_store %arg8[%c0_14, %c0_15], %20 {strides = array<i32>} : memref<8x128xf32, #tpu.memory_space<vmem>>, vector<8x128xf32>,
    %c0_i32_16 = arith.constant 0 : i32
    %22 = arith.cmpi eq, %arg1, %c0_i32_16 : i32
    %23 = arith.extui %22 : i1 to i32
    %c0_i32_17 = arith.constant 0 : i32
    %24 = arith.cmpi ne, %23, %c0_i32_17 : i32
    scf.if %24 {
      %c0_18 = arith.constant 0 : index
      %c0_19 = arith.constant 0 : index
      %25 = vector.load %arg8[%c0_18, %c0_19] : memref<8x128xf32, #tpu.memory_space<vmem>>, vector<8x128xf32>
      %c0_20 = arith.constant 0 : index
      %c0_21 = arith.constant 0 : index
      %26 = vector.load %arg7[%c0_20, %c0_21] : memref<8x128xf32, #tpu.memory_space<vmem>>, vector<8x128xf32>
      tpu.vector_store %arg7[%c0_20, %c0_21], %25 {strides = array<i32>} : memref<8x128xf32, #tpu.memory_space<vmem>>, vector<8x128xf32>,
    } else {
    }
    return
  }
  func.func @transform_0(%arg0: i32, %arg1: i32) -> (i32, i32) {
    %c0_i32 = arith.constant 0 : i32
    %c0_i32_0 = arith.constant 0 : i32
    return %arg0, %c0_i32 : i32, i32
  }
  func.func @transform_1(%arg0: i32, %arg1: i32) -> (i32, i32) {
    %c0_i32 = arith.constant 0 : i32
    %c0_i32_0 = arith.constant 0 : i32
    return %c0_i32, %arg1 : i32, i32
  }
  func.func @transform_2(%arg0: i32, %arg1: i32) -> (i32, i32) {
    %c0_i32 = arith.constant 0 : i32
    %c0_i32_0 = arith.constant 0 : i32
    return %c0_i32, %arg1 : i32, i32
  }
  func.func @transform_3(%arg0: i32, %arg1: i32) -> (i32, i32) {
    %c0_i32 = arith.constant 0 : i32
    %c0_i32_0 = arith.constant 0 : i32
    return %arg1, %c0_i32 : i32, i32
  }
  func.func @transform_4(%arg0: i32, %arg1: i32) -> (i32, i32) {
    %c0_i32 = arith.constant 0 : i32
    %c0_i32_0 = arith.constant 0 : i32
    %c0_i32_1 = arith.constant 0 : i32
    return %c0_i32, %c0_i32_0 : i32, i32
  }
  func.func @transform_5(%arg0: i32, %arg1: i32) -> (i32, i32) {
    %c0_i32 = arith.constant 0 : i32
    %c0_i32_0 = arith.constant 0 : i32
    return %arg0, %c0_i32 : i32, i32
  }
}

</mosaic_0001>

<llo_original>
// kernel: tpu_custom_call.1
$region0: #{tpu_custom_call.1}
  #allocation0 [shape = 'u32[]', space=smem, size = 0x4, offset = 0x4, fixed_abs, tag = 'smem constant byte address 0x4 - core index']
  #allocation1 [shape = 'u32[144,128]{1,0:T(1,128)}', space=vmem, size = 0x12000, scoped, tag = 'internal scratch']
  #allocation2 [shape = 'f32[8,128]{1,0:T(8,128)}', space=vmem, size = 0x1000, scoped, tag = 'scratch operand']
  %s0 = inlined_call_operand.hbm [shape: f32[16,128], index: 0, kind: input, shape index: {}]
  %s1 = inlined_call_operand.hbm [shape: f32[128,128], index: 1, kind: input, shape index: {}]
  %s2 = inlined_call_operand.vmem [shape: f32[1,128], index: 2, kind: input, shape index: {}]
  %s3 = inlined_call_operand.hbm [shape: f32[128,128], index: 3, kind: input, shape index: {}]
  %s4 = inlined_call_operand.vmem [shape: f32[1,128], index: 4, kind: input, shape index: {}]
  %s5 = inlined_call_operand.hbm [shape: f32[16,128], index: 5, kind: output, shape index: {}]
  %s6 = sld [smem:[#allocation0]]
  $region73: #{tpu_custom_call.1} parent=0
    _
  %s8 = ssub.s32 1, %s6
  %s9 = scalar_select 0, %s8, %s6
  $region1: #{tpu_custom_call.1} parent=0
    #allocation3 [shape = 'u8[8192]{0}', space=vmem, size = 0x2000, scoped, tag = 'input window, operand 0']
    #allocation4 [shape = 's32[2]{0}', space=sflag, size = 0x8, scoped, tag = 'scoped memory for tpu_custom_call.1']
    #allocation5 [shape = 's32[2]{0}', space=sflag, size = 0x8, scoped, tag = 'scoped memory for tpu_custom_call.1']
    #allocation6 [shape = 'u8[65536]{0}', space=vmem, size = 0x10000, scoped, tag = 'input window, operand 1, single buffered']
    #allocation7 [shape = 's32[1]{0}', space=sflag, size = 0x4, scoped, tag = 'scoped memory for tpu_custom_call.1']
    #allocation8 [shape = 'u8[65536]{0}', space=vmem, size = 0x10000, scoped, tag = 'input window, operand 3, single buffered']
    #allocation9 [shape = 'u8[8192]{0}', space=vmem, size = 0x2000, scoped, tag = 'output window, operand 0']
    %10 = vsyncpa [#allocation4], 0
    %s11 = scalar_lea.sflag [#allocation4], 1
    %12 = vsyncpa %s11, 0
    %13 = vsyncpa [#allocation7], 0
    %14 = vsyncpa [#allocation5], 0
    %s15 = scalar_lea.sflag [#allocation5], 1
    %16 = vsyncpa %s15, 0
    loop: start=0, step=1, limit=4
    $region2: #{tpu_custom_call.1} parent=1 // loop_pre_header
      _
    $region3: #{tpu_custom_call.1} parent=1 // loop_header
      %s18 = sphi 0, %s22
      %p19 = scmp.ge.s32.totalorder %s18, 4
      %s25 = sphi 0, %s37
      %s26 = sphi 0, %s33
      %s27 = sphi 0, %s25
      %s28 = sphi 0, %s26
      %s29 = sphi 0, %s27
      %s30 = sphi 0, %s28
      %s40 = sphi 0, %s42
      %s43 = sphi 0, %s40
      %s44 = sphi 0, %s43
      %s60 = sphi 0, %s44
      %s66 = sphi 0, %s68
      %s69 = sphi 0, %s66
      %s70 = sphi 0, %s69
      %s86 = sphi 0, %s70
      %s92 = sphi 0, %s94
      %s95 = sphi 0, %s92
      %s96 = sphi 0, %s95
      %s112 = sphi 0, %s96
      %s118 = sphi 0, %s120
      %s121 = sphi 0, %s118
      %s122 = sphi 0, %s121
      %s138 = sphi 0, %s122
      %s142 = sphi 0, %s142
      %s144 = sphi 0, %s142
      %s145 = sphi 0, %s144
      %s159 = sphi 0, %s145
      %s165 = sphi 0, %s167
      %s168 = sphi 0, %s165
      %s169 = sphi 0, %s168
      %s185 = sphi 0, %s169
    $region4: #{tpu_custom_call.1} parent=1 // loop_header_branch
      %21 = sbr.rel (%p19) target = $region8
    $region5: #{tpu_custom_call.1} parent=1 // loop_body
      %s23 = ssub.s32 %s18, 1
      %s24 = ssub.s32 %s18, 2
      %s31 = sadd.s32 1, %s26
      %p32 = scmp.ge.s32.totalorder %s31, 1
      %s33 = scalar_select %p32, 0, %s31
      %s34 = sadd.s32 1, %s25
      %s35 = scalar_select %p32, %s34, %s25
      %p36 = scmp.ge.s32.totalorder %s35, 2
      %s37 = scalar_select %p36, 0, %s35
      %s38 = ssub.s32 %s25, %s37
      %p39 = scmp.eq.s32.totalorder %s38, 0
      %s41 = sadd.s32 %s40, 1
      %s42 = scalar_select %p39, %s40, %s41
      %p45 = pneg %p39
      %p46 = scmp.eq.s32.totalorder %s18, 1
      %p47 = por %p45, %p46
      %p48 = scmp.ne.s32.totalorder %s40, %s43
      %p49 = scmp.eq.s32.totalorder %s18, 0
      %p50 = por %p48, %p49
      %p51 = scmp.ne.s32.totalorder %s40, %s43
      %p52 = scmp.eq.s32.totalorder %s23, 1
      %p53 = por %p51, %p52
      %p54 = scmp.ne.s32.totalorder %s43, %s44
      %p55 = scmp.eq.s32.totalorder %s23, 0
      %p56 = por %p54, %p55
      %p57 = scmp.ne.s32.totalorder %s43, %s44
      %p58 = scmp.eq.s32.totalorder %s24, 1
      %p59 = por %p57, %p58
      %p61 = scmp.ne.s32.totalorder %s44, %s60
      %p62 = scmp.eq.s32.totalorder %s24, 0
      %p63 = por %p61, %p62
      %s64 = ssub.s32 %s26, %s33
      %p65 = scmp.eq.s32.totalorder %s64, 0
      %s67 = sadd.s32 %s66, 1
      %s68 = scalar_select %p65, %s66, %s67
      %p71 = pneg %p65
      %p72 = scmp.eq.s32.totalorder %s18, 1
      %p73 = por %p71, %p72
      %p74 = scmp.ne.s32.totalorder %s66, %s69
      %p75 = scmp.eq.s32.totalorder %s18, 0
      %p76 = por %p74, %p75
      %p77 = scmp.ne.s32.totalorder %s66, %s69
      %p78 = scmp.eq.s32.totalorder %s23, 1
      %p79 = por %p77, %p78
      %p80 = scmp.ne.s32.totalorder %s69, %s70
      %p81 = scmp.eq.s32.totalorder %s23, 0
      %p82 = por %p80, %p81
      %p83 = scmp.ne.s32.totalorder %s69, %s70
      %p84 = scmp.eq.s32.totalorder %s24, 1
      %p85 = por %p83, %p84
      %p87 = scmp.ne.s32.totalorder %s70, %s86
      %p88 = scmp.eq.s32.totalorder %s24, 0
      %p89 = por %p87, %p88
      %s90 = ssub.s32 %s26, %s33
      %p91 = scmp.eq.s32.totalorder %s90, 0
      %s93 = sadd.s32 %s92, 1
      %s94 = scalar_select %p91, %s92, %s93
      %p97 = pneg %p91
      %p98 = scmp.eq.s32.totalorder %s18, 1
      %p99 = por %p97, %p98
      %p100 = scmp.ne.s32.totalorder %s92, %s95
      %p101 = scmp.eq.s32.totalorder %s18, 0
      %p102 = por %p100, %p101
      %p103 = scmp.ne.s32.totalorder %s92, %s95
      %p104 = scmp.eq.s32.totalorder %s23, 1
      %p105 = por %p103, %p104
      %p106 = scmp.ne.s32.totalorder %s95, %s96
      %p107 = scmp.eq.s32.totalorder %s23, 0
      %p108 = por %p106, %p107
      %p109 = scmp.ne.s32.totalorder %s95, %s96
      %p110 = scmp.eq.s32.totalorder %s24, 1
      %p111 = por %p109, %p110
      %p113 = scmp.ne.s32.totalorder %s96, %s112
      %p114 = scmp.eq.s32.totalorder %s24, 0
      %p115 = por %p113, %p114
      %s116 = ssub.s32 %s26, %s33
      %p117 = scmp.eq.s32.totalorder %s116, 0
      %s119 = sadd.s32 %s118, 1
      %s120 = scalar_select %p117, %s118, %s119
      %p123 = pneg %p117
      %p124 = scmp.eq.s32.totalorder %s18, 1
      %p125 = por %p123, %p124
      %p126 = scmp.ne.s32.totalorder %s118, %s121
      %p127 = scmp.eq.s32.totalorder %s18, 0
      %p128 = por %p126, %p127
      %p129 = scmp.ne.s32.totalorder %s118, %s121
      %p130 = scmp.eq.s32.totalorder %s23, 1
      %p131 = por %p129, %p130
      %p132 = scmp.ne.s32.totalorder %s121, %s122
      %p133 = scmp.eq.s32.totalorder %s23, 0
      %p134 = por %p132, %p133
      %p135 = scmp.ne.s32.totalorder %s121, %s122
      %p136 = scmp.eq.s32.totalorder %s24, 1
      %p137 = por %p135, %p136
      %p139 = scmp.ne.s32.totalorder %s122, %s138
      %p140 = scmp.eq.s32.totalorder %s24, 0
      %p141 = por %p139, %p140
      %s143 = sadd.s32 %s142, 1
      %p146 = scmp.eq.s32.totalorder %s18, 1
      %p147 = scmp.ne.s32.totalorder %s142, %s144
      %p148 = scmp.eq.s32.totalorder %s18, 0
      %p149 = por %p147, %p148
      %p150 = scmp.ne.s32.totalorder %s142, %s144
      %p151 = scmp.eq.s32.totalorder %s23, 1
      %p152 = por %p150, %p151
      %p153 = scmp.ne.s32.totalorder %s144, %s145
      %p154 = scmp.eq.s32.totalorder %s23, 0
      %p155 = por %p153, %p154
      %p156 = scmp.ne.s32.totalorder %s144, %s145
      %p157 = scmp.eq.s32.totalorder %s24, 1
      %p158 = por %p156, %p157
      %p160 = scmp.ne.s32.totalorder %s145, %s159
      %p161 = scmp.eq.s32.totalorder %s24, 0
      %p162 = por %p160, %p161
      %s163 = ssub.s32 %s25, %s37
      %p164 = scmp.eq.s32.totalorder %s163, 0
      %s166 = sadd.s32 %s165, 1
      %s167 = scalar_select %p164, %s165, %s166
      %p170 = pneg %p164
      %p171 = scmp.eq.s32.totalorder %s18, 1
      %p172 = por %p170, %p171
      %p173 = scmp.ne.s32.totalorder %s165, %s168
      %p174 = scmp.eq.s32.totalorder %s18, 0
      %p175 = por %p173, %p174
      %p176 = scmp.ne.s32.totalorder %s165, %s168
      %p177 = scmp.eq.s32.totalorder %s23, 1
      %p178 = por %p176, %p177
      %p179 = scmp.ne.s32.totalorder %s168, %s169
      %p180 = scmp.eq.s32.totalorder %s23, 0
      %p181 = por %p179, %p180
      %p182 = scmp.ne.s32.totalorder %s168, %s169
      %p183 = scmp.eq.s32.totalorder %s24, 1
      %p184 = por %p182, %p183
      %p186 = scmp.ne.s32.totalorder %s169, %s185
      %p187 = scmp.eq.s32.totalorder %s24, 0
      %p188 = por %p186, %p187
      %p189 = scmp.le.s32.totalorder 1, %s18
      %p190 = scmp.lt.s32.totalorder %s18, 3
      %p191 = pnand %p189, %p190
      %p192 = pneg %p191
      // Predicated region
      $region9: #{tpu_custom_call.1} parent=5 // pred_check
        _
      $region10: #{tpu_custom_call.1} parent=5 // pred_check_branch
        %194 = sbr.rel (%p191) target = $region12
      $region11: #{tpu_custom_call.1} parent=5 // pred_region
        %s195 = ssub.s32 %s18, 1
        // Predicated region
        $region13: #{tpu_custom_call.1} parent=11 // pred_check
          %p196 = pneg %p82
        $region14: #{tpu_custom_call.1} parent=11 // pred_check_branch
          %198 = sbr.rel (%p196) target = $region16
        $region15: #{tpu_custom_call.1} parent=11 // pred_region
          %s200 = ssub.s32 2048, 2048
          %201 = vsyncadd [#allocation7], %s200
          %s202 = smul.addr %s28, 128
          %s203 = scalar_lea.hbm %s1, %s202
          %s204 = sshll.u32 [#allocation6], 4
          %s205 = int_to_ptr.vmem [resolvable:$true] %s204
          %210 = dma.hbm_to_vmem [thread:$0]  %s203, 2048, %s205, [#allocation7], 128, 128, 8
        $region16: #{tpu_custom_call.1} parent=11 // pred_fallthru
          _
        // Predicated region
        $region17: #{tpu_custom_call.1} parent=11 // pred_check
          %p211 = pneg %p108
        $region18: #{tpu_custom_call.1} parent=11 // pred_check_branch
          %213 = sbr.rel (%p211) target = $region20
        $region19: #{tpu_custom_call.1} parent=11 // pred_region
          %p214 = scmp.lt.s32.totalorder %s28, 0
          %s215 = scalar_select %p214, %s28, 0
          %s216 = scalar_lea.vmem %s2, %s215
        $region20: #{tpu_custom_call.1} parent=11 // pred_fallthru
          _
        // Predicated region
        $region21: #{tpu_custom_call.1} parent=11 // pred_check
          %p217 = pneg %p134
        $region22: #{tpu_custom_call.1} parent=11 // pred_check_branch
          %219 = sbr.rel (%p217) target = $region24
        $region23: #{tpu_custom_call.1} parent=11 // pred_region
          %s220 = smul.u32 16, %s28
          %s222 = ssub.s32 2048, 2048
          %223 = vsyncadd [#allocation7], %s222
          %s224 = smul.addr %s220, 128
          %s225 = scalar_lea.hbm %s3, %s224
          %s226 = sshll.u32 [#allocation8], 4
          %s227 = int_to_ptr.vmem [resolvable:$true] %s226
          %232 = dma.hbm_to_vmem [thread:$0]  %s225, 2048, %s227, [#allocation7], 128, 128, 8
        $region24: #{tpu_custom_call.1} parent=11 // pred_fallthru
          _
        // Predicated region
        $region25: #{tpu_custom_call.1} parent=11 // pred_check
          %p233 = pneg %p155
        $region26: #{tpu_custom_call.1} parent=11 // pred_check_branch
          %235 = sbr.rel (%p233) target = $region28
        $region27: #{tpu_custom_call.1} parent=11 // pred_region
          _
        $region28: #{tpu_custom_call.1} parent=11 // pred_fallthru
          _
      $region12: #{tpu_custom_call.1} parent=5 // pred_fallthru
        _
      %p236 = scmp.lt.s32.totalorder %s18, 2
      // Predicated region
      $region29: #{tpu_custom_call.1} parent=5 // pred_check
        %p237 = pneg %p236
      $region30: #{tpu_custom_call.1} parent=5 // pred_check_branch
        %239 = sbr.rel (%p237) target = $region32
      $region31: #{tpu_custom_call.1} parent=5 // pred_region
        // Predicated region
        $region33: #{tpu_custom_call.1} parent=31 // pred_check
          %p240 = pneg %p50
        $region34: #{tpu_custom_call.1} parent=31 // pred_check_branch
          %242 = sbr.rel (%p240) target = $region36
        $region35: #{tpu_custom_call.1} parent=31 // pred_region
          %s243 = sand.u32 %s40, 1
          %s244 = scalar_lea.sflag [#allocation4], %s243
          %s245 = sand.u32 %s40, 1
          %s246 = smul.addr %s245, 8
          %s247 = scalar_lea.vmem [#allocation3], %s246
          %s249 = ssub.s32 128, 128
          %250 = vsyncadd %s244, %s249
          %s251 = smul.addr %s25, 128
          %s252 = scalar_lea.hbm %s0, %s251
          %s254 = sshll.u32 %s247, 4
          %s255 = int_to_ptr.vmem [resolvable:$true] %s254
          %257 = dma.hbm_to_vmem [thread:$0]  %s252, 128, %s255, %s244
        $region36: #{tpu_custom_call.1} parent=31 // pred_fallthru
          _
      $region32: #{tpu_custom_call.1} parent=5 // pred_fallthru
        _
      %p258 = scmp.le.s32.totalorder 1, %s18
      %p259 = scmp.lt.s32.totalorder %s18, 3
      %p260 = pnand %p258, %p259
      %p261 = pneg %p260
      // Predicated region
      $region37: #{tpu_custom_call.1} parent=5 // pred_check
        _
      $region38: #{tpu_custom_call.1} parent=5 // pred_check_branch
        %263 = sbr.rel (%p260) target = $region40
      $region39: #{tpu_custom_call.1} parent=5 // pred_region
        %s264 = ssub.s32 %s18, 1
        %s265 = sand.u32 %s43, 1
        %s266 = scalar_lea.sflag [#allocation4], %s265
        %s267 = sand.u32 %s43, 1
        %s268 = smul.addr %s267, 8
        %s269 = scalar_lea.vmem [#allocation3], %s268
        // Predicated region
        $region41: #{tpu_custom_call.1} parent=39 // pred_check
          %p270 = pneg %p56
        $region42: #{tpu_custom_call.1} parent=39 // pred_check_branch
          %272 = sbr.rel (%p270) target = $region44
        $region43: #{tpu_custom_call.1} parent=39 // pred_region
          %273 = dma.done %s266, 128
        $region44: #{tpu_custom_call.1} parent=39 // pred_fallthru
          _
        // Predicated region
        $region45: #{tpu_custom_call.1} parent=39 // pred_check
          %p274 = pneg %p82
        $region46: #{tpu_custom_call.1} parent=39 // pred_check_branch
          %276 = sbr.rel (%p274) target = $region48
        $region47: #{tpu_custom_call.1} parent=39 // pred_region
          %277 = dma.done [#allocation7], 2048
        $region48: #{tpu_custom_call.1} parent=39 // pred_fallthru
          _
        // Predicated region
        $region49: #{tpu_custom_call.1} parent=39 // pred_check
          %p278 = pneg %p134
        $region50: #{tpu_custom_call.1} parent=39 // pred_check_branch
          %280 = sbr.rel (%p278) target = $region52
        $region51: #{tpu_custom_call.1} parent=39 // pred_region
          %281 = dma.done [#allocation7], 2048
        $region52: #{tpu_custom_call.1} parent=39 // pred_fallthru
          _
        %s282 = sand.u32 %s43, 1
        %s283 = scalar_lea.sflag [#allocation4], %s282
        %s284 = sand.u32 %s43, 1
        %s285 = smul.addr %s284, 8
        %s286 = scalar_lea.vmem [#allocation3], %s285
        %p287 = pneg %p56
        %p288 = pneg %p53
        %p289 = pneg %p82
        %p290 = pneg %p79
        %p291 = scmp.lt.s32.totalorder %s28, 0
        %s292 = scalar_select %p291, %s28, 0
        %s293 = scalar_lea.vmem %s2, %s292
        %p294 = pneg %p108
        %p295 = pneg %p105
        %p296 = pneg %p134
        %p297 = pneg %p131
        %p298 = pneg %p155
        %p299 = pneg %p152
        %p300 = pneg %p181
        %p301 = pneg %p178
        %s302 = sand.u32 %s168, 1
        %s303 = scalar_lea.sflag [#allocation5], %s302
        %s304 = sand.u32 %s168, 1
        %s305 = smul.addr %s304, 8
        %s306 = scalar_lea.vmem [#allocation9], %s305
        %p307 = scmp.lt.s32.totalorder %s28, 0
        %s308 = scalar_select %p307, %s28, 0
        %s309 = scalar_lea.vmem %s2, %s308
        %s310 = smul.u32 16, %s28
        %p311 = scmp.eq.s32.totalorder %s28, 0
        // Predicated region
        $region53: #{tpu_custom_call.1} parent=39 // pred_check
          %p312 = pneg %p311
        $region54: #{tpu_custom_call.1} parent=39 // pred_check_branch
          %314 = sbr.rel (%p312) target = $region56
        $region55: #{tpu_custom_call.1} parent=39 // pred_region
          %v315 = vld [vmem:[%s4] sm:$0x1]
          %v317 = vlaneseq
          %v318 = vshrl.u32 %v317, 7
          %v319 = vsub.s32 0, %v318
          %v320 = vrot.slane %v315, %v319
          %322 = vst [vmem:[#allocation2] sm:$0xff] %v320
        $region56: #{tpu_custom_call.1} parent=39 // pred_fallthru
          _
        %v323 = vld [vmem:[%s269] sm:$0xff]
        %v324 = vld [vmem:[#allocation6] sm:$0xff]
        %v325 = vld [vmem:[#allocation6 + $0x8] sm:$0xff]
        %v326 = vld [vmem:[#allocation6 + $0x10] sm:$0xff]
        %v327 = vld [vmem:[#allocation6 + $0x18] sm:$0xff]
        %v328 = vld [vmem:[#allocation6 + $0x20] sm:$0xff]
        %v329 = vld [vmem:[#allocation6 + $0x28] sm:$0xff]
        %v330 = vld [vmem:[#allocation6 + $0x30] sm:$0xff]
        %v331 = vld [vmem:[#allocation6 + $0x38] sm:$0xff]
        %v332 = vld [vmem:[#allocation6 + $0x40] sm:$0xff]
        %v333 = vld [vmem:[#allocation6 + $0x48] sm:$0xff]
        %v334 = vld [vmem:[#allocation6 + $0x50] sm:$0xff]
        %v335 = vld [vmem:[#allocation6 + $0x58] sm:$0xff]
        %v336 = vld [vmem:[#allocation6 + $0x60] sm:$0xff]
        %v337 = vld [vmem:[#allocation6 + $0x68] sm:$0xff]
        %v338 = vld [vmem:[#allocation6 + $0x70] sm:$0xff]
        %v339 = vld [vmem:[#allocation6 + $0x78] sm:$0xff]
        %v340 = vld [vmem:[%s309] sm:$0x1]
        %v342 = vlaneseq
        %v343 = vshrl.u32 %v342, 7
        %v344 = vsub.s32 0, %v343
        %v345 = vrot.slane %v340, %v344
        %347 = vmatprep.subr.mxu0 0.0
        %348 = vmatpush1.msra.mxu0 %v324
        %349 = vmatprep.subr.mxu0 0.0
        %350 = vmatpush1.msra.mxu0 %v325
        %351 = vmatprep.subr.mxu0 0.0
        %352 = vmatpush1.msra.mxu0 %v326
        %353 = vmatprep.subr.mxu0 0.0
        %354 = vmatpush1.msra.mxu0 %v327
        %355 = vmatprep.subr.mxu0 0.0
        %356 = vmatpush1.msra.mxu0 %v328
        %357 = vmatprep.subr.mxu0 0.0
        %358 = vmatpush1.msra.mxu0 %v329
        %359 = vmatprep.subr.mxu0 0.0
        %360 = vmatpush1.msra.mxu0 %v330
        %361 = vmatprep.subr.mxu0 0.0
        %362 = vmatpush1.msra.mxu0 %v331
        %363 = vmatprep.subr.mxu0 0.0
        %364 = vmatpush1.msra.mxu0 %v332
        %365 = vmatprep.subr.mxu0 0.0
        %366 = vmatpush1.msra.mxu0 %v333
        %367 = vmatprep.subr.mxu0 0.0
        %368 = vmatpush1.msra.mxu0 %v334
        %369 = vmatprep.subr.mxu0 0.0
        %370 = vmatpush1.msra.mxu0 %v335
        %371 = vmatprep.subr.mxu0 0.0
        %372 = vmatpush1.msra.mxu0 %v336
        %373 = vmatprep.subr.mxu0 0.0
        %374 = vmatpush1.msra.mxu0 %v337
        %375 = vmatprep.subr.mxu0 0.0
        %376 = vmatpush1.msra.mxu0 %v338
        %377 = vmatprep.subr.mxu0 0.0
        %378 = vmatpush1.msra.mxu0 %v339
        %379 = vmatprep.subr.mxu0 0.0
        %380 = vmatpush1.msra.mxu0 0.0
        %381 = vmatprep.subr.mxu0 0.0
        %382 = vmatpush1.msra.mxu0 0.0
        %383 = vmatprep.subr.mxu0 0.0
        %384 = vmatpush1.msra.mxu0 0.0
        %385 = vmatprep.subr.mxu0 0.0
        %386 = vmatpush1.msra.mxu0 0.0
        %387 = vmatprep.subr.mxu0 0.0
        %388 = vmatpush1.msra.mxu0 0.0
        %389 = vmatprep.subr.mxu0 0.0
        %390 = vmatpush1.msra.mxu0 0.0
        %391 = vmatprep.subr.mxu0 0.0
        %392 = vmatpush1.msra.mxu0 0.0
        %393 = vmatprep.subr.mxu0 0.0
        %394 = vmatpush1.msra.mxu0 0.0
        %395 = vmatprep.subr.mxu0 0.0
        %396 = vmatpush1.msra.mxu0 0.0
        %397 = vmatprep.subr.mxu0 0.0
        %398 = vmatpush1.msra.mxu0 0.0
        %399 = vmatprep.subr.mxu0 0.0
        %400 = vmatpush1.msra.mxu0 0.0
        %401 = vmatprep.subr.mxu0 0.0
        %402 = vmatpush1.msra.mxu0 0.0
        %403 = vmatprep.subr.mxu0 0.0
        %404 = vmatpush1.msra.mxu0 0.0
        %405 = vmatprep.subr.mxu0 0.0
        %406 = vmatpush1.msra.mxu0 0.0
        %407 = vmatprep.subr.mxu0 0.0
        %408 = vmatpush1.msra.mxu0 0.0
        %409 = vmatprep.subr.mxu0 0.0
        %410 = vmatpush1.msra.mxu0 0.0
        %411 = vmatprep.mubr.f32.mxu0 0.0
        %412 = vmatmul.mubr.f32.gmra.mrb[0].mxu0 %v323
        %v413 = vpop.f32.mrb[0].mxu0
        %v414 = vadd.f32 %v345, %v413
        %v415 = vpop.f32.mrb[0].mxu0
        %416 = vdwg.mxu0
        %v417 = vmul.f32 %v414, 0.5
        %v418 = vmul.f32 %v414, 0.70710677
        %v419 = verf.f32.pop %v418
        %v420 = vadd.f32 %v419, 1.0
        %v421 = vmul.f32 %v417, %v420
        %v422 = vld [vmem:[#allocation2] sm:$0xff]
        %v423 = vld [vmem:[#allocation8] sm:$0xff]
        %v424 = vld [vmem:[#allocation8 + $0x8] sm:$0xff]
        %v425 = vld [vmem:[#allocation8 + $0x10] sm:$0xff]
        %v426 = vld [vmem:[#allocation8 + $0x18] sm:$0xff]
        %v427 = vld [vmem:[#allocation8 + $0x20] sm:$0xff]
        %v428 = vld [vmem:[#allocation8 + $0x28] sm:$0xff]
        %v429 = vld [vmem:[#allocation8 + $0x30] sm:$0xff]
        %v430 = vld [vmem:[#allocation8 + $0x38] sm:$0xff]
        %v431 = vld [vmem:[#allocation8 + $0x40] sm:$0xff]
        %v432 = vld [vmem:[#allocation8 + $0x48] sm:$0xff]
        %v433 = vld [vmem:[#allocation8 + $0x50] sm:$0xff]
        %v434 = vld [vmem:[#allocation8 + $0x58] sm:$0xff]
        %v435 = vld [vmem:[#allocation8 + $0x60] sm:$0xff]
        %v436 = vld [vmem:[#allocation8 + $0x68] sm:$0xff]
        %v437 = vld [vmem:[#allocation8 + $0x70] sm:$0xff]
        %v438 = vld [vmem:[#allocation8 + $0x78] sm:$0xff]
        %439 = vmatprep.subr.mxu0 0.0
        %440 = vmatpush1.msra.mxu0 %v423
        %441 = vmatprep.subr.mxu0 0.0
        %442 = vmatpush1.msra.mxu0 %v424
        %443 = vmatprep.subr.mxu0 0.0
        %444 = vmatpush1.msra.mxu0 %v425
        %445 = vmatprep.subr.mxu0 0.0
        %446 = vmatpush1.msra.mxu0 %v426
        %447 = vmatprep.subr.mxu0 0.0
        %448 = vmatpush1.msra.mxu0 %v427
        %449 = vmatprep.subr.mxu0 0.0
        %450 = vmatpush1.msra.mxu0 %v428
        %451 = vmatprep.subr.mxu0 0.0
        %452 = vmatpush1.msra.mxu0 %v429
        %453 = vmatprep.subr.mxu0 0.0
        %454 = vmatpush1.msra.mxu0 %v430
        %455 = vmatprep.subr.mxu0 0.0
        %456 = vmatpush1.msra.mxu0 %v431
        %457 = vmatprep.subr.mxu0 0.0
        %458 = vmatpush1.msra.mxu0 %v432
        %459 = vmatprep.subr.mxu0 0.0
        %460 = vmatpush1.msra.mxu0 %v433
        %461 = vmatprep.subr.mxu0 0.0
        %462 = vmatpush1.msra.mxu0 %v434
        %463 = vmatprep.subr.mxu0 0.0
        %464 = vmatpush1.msra.mxu0 %v435
        %465 = vmatprep.subr.mxu0 0.0
        %466 = vmatpush1.msra.mxu0 %v436
        %467 = vmatprep.subr.mxu0 0.0
        %468 = vmatpush1.msra.mxu0 %v437
        %469 = vmatprep.subr.mxu0 0.0
        %470 = vmatpush1.msra.mxu0 %v438
        %471 = vmatprep.subr.mxu0 0.0
        %472 = vmatpush1.msra.mxu0 0.0
        %473 = vmatprep.subr.mxu0 0.0
        %474 = vmatpush1.msra.mxu0 0.0
        %475 = vmatprep.subr.mxu0 0.0
        %476 = vmatpush1.msra.mxu0 0.0
        %477 = vmatprep.subr.mxu0 0.0
        %478 = vmatpush1.msra.mxu0 0.0
        %479 = vmatprep.subr.mxu0 0.0
        %480 = vmatpush1.msra.mxu0 0.0
        %481 = vmatprep.subr.mxu0 0.0
        %482 = vmatpush1.msra.mxu0 0.0
        %483 = vmatprep.subr.mxu0 0.0
        %484 = vmatpush1.msra.mxu0 0.0
        %485 = vmatprep.subr.mxu0 0.0
        %486 = vmatpush1.msra.mxu0 0.0
        %487 = vmatprep.subr.mxu0 0.0
        %488 = vmatpush1.msra.mxu0 0.0
        %489 = vmatprep.subr.mxu0 0.0
        %490 = vmatpush1.msra.mxu0 0.0
        %491 = vmatprep.subr.mxu0 0.0
        %492 = vmatpush1.msra.mxu0 0.0
        %493 = vmatprep.subr.mxu0 0.0
        %494 = vmatpush1.msra.mxu0 0.0
        %495 = vmatprep.subr.mxu0 0.0
        %496 = vmatpush1.msra.mxu0 0.0
        %497 = vmatprep.subr.mxu0 0.0
        %498 = vmatpush1.msra.mxu0 0.0
        %499 = vmatprep.subr.mxu0 0.0
        %500 = vmatpush1.msra.mxu0 0.0
        %501 = vmatprep.subr.mxu0 0.0
        %502 = vmatpush1.msra.mxu0 0.0
        %503 = vmatprep.mubr.f32.mxu0 0.0
        %504 = vmatmul.mubr.f32.gmra.mrb[0].mxu0 %v421
        %v505 = vpop.f32.mrb[0].mxu0
        %v506 = vadd.f32 0.0, %v505
        %v507 = vpop.f32.mrb[0].mxu0
        %508 = vdwg.mxu0
        %v509 = vadd.f32 %v422, %v506
        %510 = vst [vmem:[#allocation2] sm:$0xff] %v509
        // Predicated region
        $region57: #{tpu_custom_call.1} parent=39 // pred_check
          %p511 = pneg %p311
        $region58: #{tpu_custom_call.1} parent=39 // pred_check_branch
          %513 = sbr.rel (%p511) target = $region60
        $region59: #{tpu_custom_call.1} parent=39 // pred_region
          %v514 = vld [vmem:[#allocation2] sm:$0xff]
          %515 = vst [vmem:[%s306] sm:$0xff] %v514
        $region60: #{tpu_custom_call.1} parent=39 // pred_fallthru
          _
        %s516 = sand.u32 %s168, 1
        %s517 = scalar_lea.sflag [#allocation5], %s516
        %s518 = sand.u32 %s168, 1
        %s519 = smul.addr %s518, 8
        %s520 = scalar_lea.vmem [#allocation9], %s519
        // Predicated region
        $region61: #{tpu_custom_call.1} parent=39 // pred_check
          %p521 = pneg %p178
        $region62: #{tpu_custom_call.1} parent=39 // pred_check_branch
          %523 = sbr.rel (%p521) target = $region64
        $region63: #{tpu_custom_call.1} parent=39 // pred_region
          %s525 = ssub.s32 128, 128
          %526 = vsyncadd %s517, %s525
          %s527 = smul.addr %s27, 128
          %s528 = scalar_lea.hbm %s5, %s527
          %s530 = sshll.u32 %s520, 4
          %s531 = int_to_ptr.vmem [resolvable:$true] %s530
          %533 = dma.vmem_to_hbm [thread:$0]  %s531, 128, %s528, %s517
        $region64: #{tpu_custom_call.1} parent=39 // pred_fallthru
          _
      $region40: #{tpu_custom_call.1} parent=5 // pred_fallthru
        _
      %p534 = scmp.le.s32.totalorder 2, %s18
      // Predicated region
      $region65: #{tpu_custom_call.1} parent=5 // pred_check
        %p535 = pneg %p534
      $region66: #{tpu_custom_call.1} parent=5 // pred_check_branch
        %537 = sbr.rel (%p535) target = $region68
      $region67: #{tpu_custom_call.1} parent=5 // pred_region
        %s538 = ssub.s32 %s18, 2
        // Predicated region
        $region69: #{tpu_custom_call.1} parent=67 // pred_check
          %p539 = pneg %p184
        $region70: #{tpu_custom_call.1} parent=67 // pred_check_branch
          %541 = sbr.rel (%p539) target = $region72
        $region71: #{tpu_custom_call.1} parent=67 // pred_region
          %s542 = sand.u32 %s169, 1
          %s543 = scalar_lea.sflag [#allocation5], %s542
          %s544 = sand.u32 %s169, 1
          %s545 = smul.addr %s544, 8
          %s546 = scalar_lea.vmem [#allocation9], %s545
          %547 = dma.done %s543, 128
        $region72: #{tpu_custom_call.1} parent=67 // pred_fallthru
          _
      $region68: #{tpu_custom_call.1} parent=5 // pred_fallthru
        _
    $region6: #{tpu_custom_call.1} parent=1 // loop_footer
      %s22 = sadd.s32 1, %s18
    $region7: #{tpu_custom_call.1} parent=1 // loop_footer_branch
      %17 = sbr.rel target = $region3
    $region8: #{tpu_custom_call.1} parent=1 // loop_exit
      _
    %548 = vsyncpa [#allocation4], 1
    %s549 = scalar_lea.sflag [#allocation4], 1
    %550 = vsyncpa %s549, 1
    %551 = vsyncpa [#allocation7], 1
    %552 = vsyncpa [#allocation5], 1
    %s553 = scalar_lea.sflag [#allocation5], 1
    %554 = vsyncpa %s553, 1

</llo_original>
